<compile_context>
chip_gen: v5e
topology: v5e:2x2
jax: 0.10.0
libtpu: 0.0.40
codegen_flags: <defaults>
</compile_context>

<pallas_src>
import functools

import jax
import jax.numpy as jnp
from jax.experimental import pallas as pl
from jax.experimental.pallas import tpu as pltpu


def _num_tensorcores() -> int:
    """Conservative TensorCore count: only known 2-TC chips get a parallel axis."""
    try:
        kind = jax.devices()[0].device_kind.lower()
    except Exception:
        return 1
    if ("v4" in kind) or ("v5p" in kind) or ("v7" in kind) or ("7x" in kind):
        return 2
    return 1


def _vmem_limit_bytes() -> int:
    """Scoped-VMEM limit: generous, but with headroom below physical VMEM."""
    try:
        cap = int(pltpu.get_tpu_info().vmem_capacity_bytes)
    except Exception:
        cap = 64 << 20          # v7x per-TC physical as the safe fallback
    return int(max(32 << 20, min(cap - (16 << 20), 96 << 20)))


def _mixed_loss_kernel(pred_ref, true_ref,
                       facc_ref, iacc_ref, pacc_ref, tacc_ref,
                       *, gamma: float, sub: int):
    """Elementwise focal/dice math on a (B, TR, 128) tile + vreg-granular folds.

    Accumulates into resident (B, SUB, 128) partial sums across the trailing
    (reduction) grid axis; one independent partial per parallel chunk.
    """
    j = pl.program_id(1)     # reduction step over pixel-row tiles

    @pl.when(j == 0)
    def _():
        facc_ref[...] = jnp.zeros_like(facc_ref)
        iacc_ref[...] = jnp.zeros_like(iacc_ref)
        pacc_ref[...] = jnp.zeros_like(pacc_ref)
        tacc_ref[...] = jnp.zeros_like(tacc_ref)

    p = pred_ref[...].astype(jnp.float32)   # (B, TR, 128) logits
    t = true_ref[...].astype(jnp.float32)   # (B, TR, 128) {0,1} masks

    # Numerically-stable BCE-with-logits using only exp / log on the EUP:
    #   bce = relu(p) - p*t + log(1 + exp(-|p|))
    e = jnp.exp(-jnp.abs(p))                 # EUP exp
    one_p_e = 1.0 + e
    log_term = jnp.log(one_p_e)              # EUP log
    bce = jnp.maximum(p, 0.0) - p * t + log_term

    # sigmoid(p) from e: approx reciprocal (EUP) + one Newton step (VPU).
    r = pl.reciprocal(one_p_e, approx=True)
    r = r * (2.0 - one_p_e * r)              # Newton refine -> f32 accuracy
    s = jnp.where(p >= 0.0, r, e * r)

    # For binary t: 1 - exp(-bce) == |s - t|, so the focal weight collapses.
    d = s - t
    g = float(gamma)
    if g == 2.0:
        w = d * d
    elif g == float(int(g)) and 0.0 <= g <= 8.0:
        ad = jnp.abs(d)
        w = jnp.ones_like(ad)
        for _ in range(int(g)):
            w = w * ad
    else:
        w = jnp.abs(d) ** g
    focal_elem = w * bce

    bsz, tr, _ = p.shape

    def fold(x):
        # Stop the sublane fold at vreg granularity (pure VALU adds); the tiny
        # 8-way fold happens once in the JAX glue.
        if sub == 8:
            return jnp.sum(x.reshape(bsz, tr // 8, 8, 128), axis=1)
        return jnp.sum(x, axis=1, keepdims=True)   # small / ragged single block

    facc_ref[...] += fold(focal_elem)
    iacc_ref[...] += fold(s * t)
    pacc_ref[...] += fold(s)
    tacc_ref[...] += fold(t)


def _elem_sums(p, t, gamma):
    """Plain-JAX partial sums for the small ragged row tail (rarely used)."""
    p = p.astype(jnp.float32)
    t = t.astype(jnp.float32)
    bce = jnp.maximum(p, 0.0) - p * t + jnp.log1p(jnp.exp(-jnp.abs(p)))
    s = jax.nn.sigmoid(p)
    d = jnp.abs(s - t)
    w = d * d if float(gamma) == 2.0 else d ** gamma
    b = p.shape[0]
    s2 = s.reshape(b, -1)
    t2 = t.reshape(b, -1)
    return (jnp.sum(w * bce),
            jnp.sum(s2 * t2, axis=1),
            jnp.sum(s2, axis=1),
            jnp.sum(t2, axis=1))


def mixed_loss(y_pred, y_true, alpha: float = 10.0, gamma: float = 2.0,
               dice_smooth: float = 1.0):
    """JAX/Pallas equivalent of MixedLoss.forward.

    y_pred, y_true: (B, 1, H, W) or (B, H, W) — logits and {0,1} masks.
    Returns a scalar float32 loss: alpha * focal_mean - log(mean(dice)).
    """
    if y_pred.shape != y_true.shape:
        if y_pred.ndim == 4 and y_pred.shape[1] == 1 and y_true.ndim == 3:
            y_pred = jnp.squeeze(y_pred, axis=1)
        elif y_true.ndim == 4 and y_true.shape[1] == 1 and y_pred.ndim == 3:
            y_true = jnp.squeeze(y_true, axis=1)
        else:
            raise ValueError(
                f"Target size {y_true.shape} incompatible with {y_pred.shape}")

    # Keep streams narrow: bool masks become bf16 (not f32); kernel widens tiles.
    if y_true.dtype == jnp.bool_:
        y_true = y_true.astype(jnp.bfloat16)

    B = y_pred.shape[0]
    pred2d = jnp.reshape(y_pred, (B, -1))
    true2d = jnp.reshape(y_true, (B, -1))
    N = pred2d.shape[1]

    # Column pad to lane granularity only when needed.  Padded elements use
    # p = -1e4 (finite!) and t = 0 so they contribute exactly 0 everywhere.
    rem = N % 128
    if rem:
        pad = 128 - rem
        pred2d = jnp.pad(pred2d, ((0, 0), (0, pad)), constant_values=-1e4)
        true2d = jnp.pad(true2d, ((0, 0), (0, pad)), constant_values=0)
    NR = pred2d.shape[1] // 128
    pred3d = pred2d.reshape(B, NR, 128)     # free reshape (contiguous)
    true3d = true2d.reshape(B, NR, 128)

    # Row tile: multiple of 32 rows (legal for f32 / bf16 / int8 streams),
    # ~2 MiB f32-equivalent per input tile to amortize per-step overhead.
    GRAN = 32
    ELEM_BUDGET = 512 * 1024                 # elements per tile (~2 MiB f32)
    tr_cap = max(GRAN, (ELEM_BUDGET // (B * 128)) // GRAN * GRAN)
    if NR <= tr_cap:
        # Single block covering the full row extent (no divisibility needed).
        TR, NP, NJ = NR, 1, 1
        NR_main = NR
    else:
        TR = tr_cap
        blocks = NR // TR
        NP = 2 if (_num_tensorcores() >= 2 and blocks >= 2) else 1
        NJ = blocks // NP
        NR_main = NP * NJ * TR               # block-aligned prefix; tail -> glue
    SUB = 8 if TR % 8 == 0 else 1

    kernel = functools.partial(_mixed_loss_kernel, gamma=float(gamma), sub=SUB)

    acc_shape = jax.ShapeDtypeStruct((NP, B, SUB, 128), jnp.float32)
    acc_spec = pl.BlockSpec((None, B, SUB, 128), lambda pi, j: (pi, 0, 0, 0))
    in_spec = pl.BlockSpec((B, TR, 128), lambda pi, j: (0, pi * NJ + j, 0))

    bytes_accessed = (B * NR_main * 128
                      * (pred3d.dtype.itemsize + true3d.dtype.itemsize)
                      + 4 * NP * B * SUB * 128 * 4)
    cost = pl.CostEstimate(flops=int(16 * B * NR_main * 128),
                           transcendentals=int(3 * B * NR_main * 128),
                           bytes_accessed=int(bytes_accessed))

    facc, iacc, pacc, tacc = pl.pallas_call(
        kernel,
        out_shape=(acc_shape, acc_shape, acc_shape, acc_shape),
        grid_spec=pltpu.PrefetchScalarGridSpec(
            num_scalar_prefetch=0,
            grid=(NP, NJ),
            in_specs=[in_spec, in_spec],
            out_specs=[acc_spec, acc_spec, acc_spec, acc_spec],
        ),
        compiler_params=pltpu.CompilerParams(
            dimension_semantics=("parallel", "arbitrary"),
            vmem_limit_bytes=_vmem_limit_bytes()),
        cost_estimate=cost,
    )(pred3d, true3d)

    # Tiny final reductions + scalar combination in JAX glue.
    focal_sum = jnp.sum(facc)
    inter = jnp.sum(iacc, axis=(0, 2, 3))    # (B,)
    psum = jnp.sum(pacc, axis=(0, 2, 3))
    tsum = jnp.sum(tacc, axis=(0, 2, 3))

    if NR_main < NR:
        # Ragged row tail (< 2 tiles): plain-JAX, avoids padding both inputs.
        fs2, i2, p2, t2 = _elem_sums(pred3d[:, NR_main:, :],
                                     true3d[:, NR_main:, :], gamma)
        focal_sum = focal_sum + fs2
        inter = inter + i2
        psum = psum + p2
        tsum = tsum + t2

    focal_loss = focal_sum / (B * N)          # mean over ALL original elements
    dice = (2.0 * inter + dice_smooth) / (psum + tsum + dice_smooth)
    return alpha * focal_loss - jnp.log(jnp.mean(dice))


def _reference(y_pred, y_true, alpha=10.0, gamma=2.0, dice_smooth=1.0):
    """Pure-JAX reference mirroring the PyTorch formulas for a sanity check."""
    p = y_pred.astype(jnp.float32)
    t = y_true.astype(jnp.float32)
    max_val = jnp.maximum(-p, 0.0)
    bce = p - p * t + max_val + jnp.log(jnp.exp(-max_val) + jnp.exp(-p - max_val))
    pt = jnp.exp(-bce)
    focal = jnp.mean(((1.0 - pt) ** gamma) * bce)
    B = p.shape[0]
    sp = jax.nn.sigmoid(p).reshape(B, -1)
    tt = t.reshape(B, -1)
    inter = jnp.sum(sp * tt, axis=1)
    union = jnp.sum(sp, axis=1) + jnp.sum(tt, axis=1)
    dice = (2.0 * inter + dice_smooth) / (union + dice_smooth)
    return alpha * focal - jnp.log(jnp.mean(dice))


if __name__ == "__main__":
    key = jax.random.PRNGKey(0)
    k1, k2, k3, k4 = jax.random.split(key, 4)

    # Case 1: standard small binary-segmentation shapes (N divisible by 128).
    B, C, H, W = 2, 1, 16, 16
    y_pred = jax.random.normal(k1, (B, C, H, W), dtype=jnp.float32)
    y_true = (jax.random.uniform(k2, (B, C, H, W)) > 0.5).astype(jnp.float32)
    loss = jax.block_until_ready(mixed_loss(y_pred, y_true))
    ref = _reference(y_pred, y_true)
    assert jnp.allclose(loss, ref, rtol=1e-5, atol=1e-5), (loss, ref)

    # Case 2: non-128-divisible spatial size + bool mask (pad + narrow-mask paths).
    H2, W2 = 20, 20
    y_pred2 = jax.random.normal(k3, (B, C, H2, W2), dtype=jnp.float32)
    y_true2 = jax.random.uniform(k4, (B, C, H2, W2)) > 0.5        # bool
    loss2 = jax.block_until_ready(mixed_loss(y_pred2, y_true2))
    ref2 = _reference(y_pred2, y_true2)
    assert jnp.allclose(loss2, ref2, rtol=1e-5, atol=1e-5), (loss2, ref2)

    print("KERNEL_OK")
</pallas_src>

<mosaic_0001>
module attributes {stable_mosaic.version = 11 : i64} {
  func.func @_mixed_loss_kernel(%arg0: i32, %arg1: i32, %arg2: memref<2x2x128xf32, #tpu.memory_space<vmem>>, %arg3: memref<2x2x128xf32, #tpu.memory_space<vmem>>, %arg4: memref<1x2x1x128xf32, #tpu.memory_space<vmem>>, %arg5: memref<1x2x1x128xf32, #tpu.memory_space<vmem>>, %arg6: memref<1x2x1x128xf32, #tpu.memory_space<vmem>>, %arg7: memref<1x2x1x128xf32, #tpu.memory_space<vmem>>) attributes {dimension_semantics = [#tpu.dimension_semantics<parallel>, #tpu.dimension_semantics<arbitrary>], iteration_bounds = array<i64: 1, 1>, scalar_prefetch = 0 : i64, scratch_operands = 0 : i64, tpu.core_type = #tpu.core_type<tc>, window_params = [{transform_indices = @transform_0, window_bounds = array<i64: 2, 2, 128>}, {transform_indices = @transform_1, window_bounds = array<i64: 2, 2, 128>}, {transform_indices = @transform_2, window_bounds = array<i64: 1, 2, 1, 128>}, {transform_indices = @transform_3, window_bounds = array<i64: 1, 2, 1, 128>}, {transform_indices = @transform_4, window_bounds = array<i64: 1, 2, 1, 128>}, {transform_indices = @transform_5, window_bounds = array<i64: 1, 2, 1, 128>}]} {
    %c0_i32 = arith.constant 0 : i32
    %0 = arith.cmpi eq, %arg1, %c0_i32 : i32
    %1 = arith.extui %0 : i1 to i32
    %c0_i32_0 = arith.constant 0 : i32
    %2 = arith.cmpi ne, %1, %c0_i32_0 : i32
    scf.if %2 {
      %cst_46 = arith.constant 0.000000e+00 : f32
      %62 = vector.broadcast %cst_46 : f32 to vector<2x1x128xf32>
      %c0_47 = arith.constant 0 : index
      %c0_48 = arith.constant 0 : index
      %c0_49 = arith.constant 0 : index
      %c0_50 = arith.constant 0 : index
      %63 = vector.load %arg4[%c0_47, %c0_48, %c0_49, %c0_50] : memref<1x2x1x128xf32, #tpu.memory_space<vmem>>, vector<1x2x1x128xf32>
      %64 = vector.shape_cast %63 : vector<1x2x1x128xf32> to vector<2x1x128xf32>
      %65 = vector.shape_cast %62 : vector<2x1x128xf32> to vector<1x2x1x128xf32>
      tpu.vector_store %arg4[%c0_47, %c0_48, %c0_49, %c0_50], %65 {strides = array<i32>} : memref<1x2x1x128xf32, #tpu.memory_space<vmem>>, vector<1x2x1x128xf32>,
      %cst_51 = arith.constant 0.000000e+00 : f32
      %66 = vector.broadcast %cst_51 : f32 to vector<2x1x128xf32>
      %c0_52 = arith.constant 0 : index
      %c0_53 = arith.constant 0 : index
      %c0_54 = arith.constant 0 : index
      %c0_55 = arith.constant 0 : index
      %67 = vector.load %arg5[%c0_52, %c0_53, %c0_54, %c0_55] : memref<1x2x1x128xf32, #tpu.memory_space<vmem>>, vector<1x2x1x128xf32>
      %68 = vector.shape_cast %67 : vector<1x2x1x128xf32> to vector<2x1x128xf32>
      %69 = vector.shape_cast %66 : vector<2x1x128xf32> to vector<1x2x1x128xf32>
      tpu.vector_store %arg5[%c0_52, %c0_53, %c0_54, %c0_55], %69 {strides = array<i32>} : memref<1x2x1x128xf32, #tpu.memory_space<vmem>>, vector<1x2x1x128xf32>,
      %cst_56 = arith.constant 0.000000e+00 : f32
      %70 = vector.broadcast %cst_56 : f32 to vector<2x1x128xf32>
      %c0_57 = arith.constant 0 : index
      %c0_58 = arith.constant 0 : index
      %c0_59 = arith.constant 0 : index
      %c0_60 = arith.constant 0 : index
      %71 = vector.load %arg6[%c0_57, %c0_58, %c0_59, %c0_60] : memref<1x2x1x128xf32, #tpu.memory_space<vmem>>, vector<1x2x1x128xf32>
      %72 = vector.shape_cast %71 : vector<1x2x1x128xf32> to vector<2x1x128xf32>
      %73 = vector.shape_cast %70 : vector<2x1x128xf32> to vector<1x2x1x128xf32>
      tpu.vector_store %arg6[%c0_57, %c0_58, %c0_59, %c0_60], %73 {strides = array<i32>} : memref<1x2x1x128xf32, #tpu.memory_space<vmem>>, vector<1x2x1x128xf32>,
      %cst_61 = arith.constant 0.000000e+00 : f32
      %74 = vector.broadcast %cst_61 : f32 to vector<2x1x128xf32>
      %c0_62 = arith.constant 0 : index
      %c0_63 = arith.constant 0 : index
      %c0_64 = arith.constant 0 : index
      %c0_65 = arith.constant 0 : index
      %75 = vector.load %arg7[%c0_62, %c0_63, %c0_64, %c0_65] : memref<1x2x1x128xf32, #tpu.memory_space<vmem>>, vector<1x2x1x128xf32>
      %76 = vector.shape_cast %75 : vector<1x2x1x128xf32> to vector<2x1x128xf32>
      %77 = vector.shape_cast %74 : vector<2x1x128xf32> to vector<1x2x1x128xf32>
      tpu.vector_store %arg7[%c0_62, %c0_63, %c0_64, %c0_65], %77 {strides = array<i32>} : memref<1x2x1x128xf32, #tpu.memory_space<vmem>>, vector<1x2x1x128xf32>,
    } else {
    }
    %c0 = arith.constant 0 : index
    %c0_1 = arith.constant 0 : index
    %c0_2 = arith.constant 0 : index
    %3 = vector.load %arg2[%c0, %c0_1, %c0_2] : memref<2x2x128xf32, #tpu.memory_space<vmem>>, vector<2x2x128xf32>
    %c0_3 = arith.constant 0 : index
    %c0_4 = arith.constant 0 : index
    %c0_5 = arith.constant 0 : index
    %4 = vector.load %arg3[%c0_3, %c0_4, %c0_5] : memref<2x2x128xf32, #tpu.memory_space<vmem>>, vector<2x2x128xf32>
    %5 = math.absf %3 : vector<2x2x128xf32>
    %cst = arith.constant 0.000000e+00 : f32
    %6 = vector.broadcast %cst : f32 to vector<2x2x128xf32>
    %7 = arith.subf %6, %5 : vector<2x2x128xf32>
    %8 = math.exp %7 : vector<2x2x128xf32>
    %cst_6 = arith.constant 1.000000e+00 : f32
    %9 = vector.broadcast %cst_6 : f32 to vector<2x2x128xf32>
    %10 = arith.addf %9, %8 : vector<2x2x128xf32>
    %11 = math.log %10 : vector<2x2x128xf32>
    %cst_7 = arith.constant 0.000000e+00 : f32
    %12 = vector.broadcast %cst_7 : f32 to vector<2x2x128xf32>
    %13 = arith.maximumf %3, %12 : vector<2x2x128xf32>
    %14 = arith.mulf %3, %4 : vector<2x2x128xf32>
    %15 = arith.subf %13, %14 : vector<2x2x128xf32>
    %16 = arith.addf %15, %11 : vector<2x2x128xf32>
    %17 = tpu.reciprocal %10 {approx = true} : vector<2x2x128xf32> -> vector<2x2x128xf32>
    %18 = arith.mulf %10, %17 : vector<2x2x128xf32>
    %cst_8 = arith.constant 2.000000e+00 : f32
    %19 = vector.broadcast %cst_8 : f32 to vector<2x2x128xf32>
    %20 = arith.subf %19, %18 : vector<2x2x128xf32>
    %21 = arith.mulf %17, %20 : vector<2x2x128xf32>
    %cst_9 = arith.constant 0.000000e+00 : f32
    %22 = vector.broadcast %cst_9 : f32 to vector<2x2x128xf32>
    %23 = arith.cmpf oge, %3, %22 : vector<2x2x128xf32>
    %24 = arith.mulf %8, %21 : vector<2x2x128xf32>
    %25 = arith.select %23, %21, %24 : vector<2x2x128xi1>, vector<2x2x128xf32>
    %26 = arith.subf %25, %4 : vector<2x2x128xf32>
    %27 = arith.mulf %26, %26 : vector<2x2x128xf32>
    %28 = arith.mulf %27, %16 : vector<2x2x128xf32>
    %c0_10 = arith.constant 0 : index
    %c0_11 = arith.constant 0 : index
    %c0_12 = arith.constant 0 : index
    %c0_13 = arith.constant 0 : index
    %29 = vector.load %arg4[%c0_10, %c0_11, %c0_12, %c0_13] : memref<1x2x1x128xf32, #tpu.memory_space<vmem>>, vector<1x2x1x128xf32>
    %30 = vector.shape_cast %29 : vector<1x2x1x128xf32> to vector<2x1x128xf32>
    %cst_14 = arith.constant dense<0.000000e+00> : vector<2x128xf32>
    %31 = vector.multi_reduction <add>, %28, %cst_14 [1] : vector<2x2x128xf32> to vector<2x128xf32>
    %32 = vector.shape_cast %31 : vector<2x128xf32> to vector<2x1x128xf32>
    %33 = arith.addf %30, %32 : vector<2x1x128xf32>
    %c0_15 = arith.constant 0 : index
    %c0_16 = arith.constant 0 : index
    %c0_17 = arith.constant 0 : index
    %c0_18 = arith.constant 0 : index
    %34 = vector.load %arg4[%c0_15, %c0_16, %c0_17, %c0_18] : memref<1x2x1x128xf32, #tpu.memory_space<vmem>>, vector<1x2x1x128xf32>
    %35 = vector.shape_cast %34 : vector<1x2x1x128xf32> to vector<2x1x128xf32>
    %36 = vector.shape_cast %33 : vector<2x1x128xf32> to vector<1x2x1x128xf32>
    tpu.vector_store %arg4[%c0_15, %c0_16, %c0_17, %c0_18], %36 {strides = array<i32>} : memref<1x2x1x128xf32, #tpu.memory_space<vmem>>, vector<1x2x1x128xf32>,
    %c0_19 = arith.constant 0 : index
    %c0_20 = arith.constant 0 : index
    %c0_21 = arith.constant 0 : index
    %c0_22 = arith.constant 0 : index
    %37 = vector.load %arg5[%c0_19, %c0_20, %c0_21, %c0_22] : memref<1x2x1x128xf32, #tpu.memory_space<vmem>>, vector<1x2x1x128xf32>
    %38 = vector.shape_cast %37 : vector<1x2x1x128xf32> to vector<2x1x128xf32>
    %39 = arith.mulf %25, %4 : vector<2x2x128xf32>
    %cst_23 = arith.constant dense<0.000000e+00> : vector<2x128xf32>
    %40 = vector.multi_reduction <add>, %39, %cst_23 [1] : vector<2x2x128xf32> to vector<2x128xf32>
    %41 = vector.shape_cast %40 : vector<2x128xf32> to vector<2x1x128xf32>
    %42 = arith.addf %38, %41 : vector<2x1x128xf32>
    %c0_24 = arith.constant 0 : index
    %c0_25 = arith.constant 0 : index
    %c0_26 = arith.constant 0 : index
    %c0_27 = arith.constant 0 : index
    %43 = vector.load %arg5[%c0_24, %c0_25, %c0_26, %c0_27] : memref<1x2x1x128xf32, #tpu.memory_space<vmem>>, vector<1x2x1x128xf32>
    %44 = vector.shape_cast %43 : vector<1x2x1x128xf32> to vector<2x1x128xf32>
    %45 = vector.shape_cast %42 : vector<2x1x128xf32> to vector<1x2x1x128xf32>
    tpu.vector_store %arg5[%c0_24, %c0_25, %c0_26, %c0_27], %45 {strides = array<i32>} : memref<1x2x1x128xf32, #tpu.memory_space<vmem>>, vector<1x2x1x128xf32>,
    %c0_28 = arith.constant 0 : index
    %c0_29 = arith.constant 0 : index
    %c0_30 = arith.constant 0 : index
    %c0_31 = arith.constant 0 : index
    %46 = vector.load %arg6[%c0_28, %c0_29, %c0_30, %c0_31] : memref<1x2x1x128xf32, #tpu.memory_space<vmem>>, vector<1x2x1x128xf32>
    %47 = vector.shape_cast %46 : vector<1x2x1x128xf32> to vector<2x1x128xf32>
    %cst_32 = arith.constant dense<0.000000e+00> : vector<2x128xf32>
    %48 = vector.multi_reduction <add>, %25, %cst_32 [1] : vector<2x2x128xf32> to vector<2x128xf32>
    %49 = vector.shape_cast %48 : vector<2x128xf32> to vector<2x1x128xf32>
    %50 = arith.addf %47, %49 : vector<2x1x128xf32>
    %c0_33 = arith.constant 0 : index
    %c0_34 = arith.constant 0 : index
    %c0_35 = arith.constant 0 : index
    %c0_36 = arith.constant 0 : index
    %51 = vector.load %arg6[%c0_33, %c0_34, %c0_35, %c0_36] : memref<1x2x1x128xf32, #tpu.memory_space<vmem>>, vector<1x2x1x128xf32>
    %52 = vector.shape_cast %51 : vector<1x2x1x128xf32> to vector<2x1x128xf32>
    %53 = vector.shape_cast %50 : vector<2x1x128xf32> to vector<1x2x1x128xf32>
    tpu.vector_store %arg6[%c0_33, %c0_34, %c0_35, %c0_36], %53 {strides = array<i32>} : memref<1x2x1x128xf32, #tpu.memory_space<vmem>>, vector<1x2x1x128xf32>,
    %c0_37 = arith.constant 0 : index
    %c0_38 = arith.constant 0 : index
    %c0_39 = arith.constant 0 : index
    %c0_40 = arith.constant 0 : index
    %54 = vector.load %arg7[%c0_37, %c0_38, %c0_39, %c0_40] : memref<1x2x1x128xf32, #tpu.memory_space<vmem>>, vector<1x2x1x128xf32>
    %55 = vector.shape_cast %54 : vector<1x2x1x128xf32> to vector<2x1x128xf32>
    %cst_41 = arith.constant dense<0.000000e+00> : vector<2x128xf32>
    %56 = vector.multi_reduction <add>, %4, %cst_41 [1] : vector<2x2x128xf32> to vector<2x128xf32>
    %57 = vector.shape_cast %56 : vector<2x128xf32> to vector<2x1x128xf32>
    %58 = arith.addf %55, %57 : vector<2x1x128xf32>
    %c0_42 = arith.constant 0 : index
    %c0_43 = arith.constant 0 : index
    %c0_44 = arith.constant 0 : index
    %c0_45 = arith.constant 0 : index
    %59 = vector.load %arg7[%c0_42, %c0_43, %c0_44, %c0_45] : memref<1x2x1x128xf32, #tpu.memory_space<vmem>>, vector<1x2x1x128xf32>
    %60 = vector.shape_cast %59 : vector<1x2x1x128xf32> to vector<2x1x128xf32>
    %61 = vector.shape_cast %58 : vector<2x1x128xf32> to vector<1x2x1x128xf32>
    tpu.vector_store %arg7[%c0_42, %c0_43, %c0_44, %c0_45], %61 {strides = array<i32>} : memref<1x2x1x128xf32, #tpu.memory_space<vmem>>, vector<1x2x1x128xf32>,
    return
  }
  func.func @transform_0(%arg0: i32, %arg1: i32) -> (i32, i32, i32) {
    %c1_i32 = arith.constant 1 : i32
    %0 = arith.muli %arg0, %c1_i32 : i32
    %1 = arith.addi %0, %arg1 : i32
    %c0_i32 = arith.constant 0 : i32
    %c0_i32_0 = arith.constant 0 : i32
    %c0_i32_1 = arith.constant 0 : i32
    return %c0_i32, %1, %c0_i32_0 : i32, i32, i32
  }
  func.func @transform_1(%arg0: i32, %arg1: i32) -> (i32, i32, i32) {
    %c1_i32 = arith.constant 1 : i32
    %0 = arith.muli %arg0, %c1_i32 : i32
    %1 = arith.addi %0, %arg1 : i32
    %c0_i32 = arith.constant 0 : i32
    %c0_i32_0 = arith.constant 0 : i32
    %c0_i32_1 = arith.constant 0 : i32
    return %c0_i32, %1, %c0_i32_0 : i32, i32, i32
  }
  func.func @transform_2(%arg0: i32, %arg1: i32) -> (i32, i32, i32, i32) {
    %c0_i32 = arith.constant 0 : i32
    %c0_i32_0 = arith.constant 0 : i32
    %c0_i32_1 = arith.constant 0 : i32
    %c0_i32_2 = arith.constant 0 : i32
    return %arg0, %c0_i32, %c0_i32_0, %c0_i32_1 : i32, i32, i32, i32
  }
  func.func @transform_3(%arg0: i32, %arg1: i32) -> (i32, i32, i32, i32) {
    %c0_i32 = arith.constant 0 : i32
    %c0_i32_0 = arith.constant 0 : i32
    %c0_i32_1 = arith.constant 0 : i32
    %c0_i32_2 = arith.constant 0 : i32
    return %arg0, %c0_i32, %c0_i32_0, %c0_i32_1 : i32, i32, i32, i32
  }
  func.func @transform_4(%arg0: i32, %arg1: i32) -> (i32, i32, i32, i32) {
    %c0_i32 = arith.constant 0 : i32
    %c0_i32_0 = arith.constant 0 : i32
    %c0_i32_1 = arith.constant 0 : i32
    %c0_i32_2 = arith.constant 0 : i32
    return %arg0, %c0_i32, %c0_i32_0, %c0_i32_1 : i32, i32, i32, i32
  }
  func.func @transform_5(%arg0: i32, %arg1: i32) -> (i32, i32, i32, i32) {
    %c0_i32 = arith.constant 0 : i32
    %c0_i32_0 = arith.constant 0 : i32
    %c0_i32_1 = arith.constant 0 : i32
    %c0_i32_2 = arith.constant 0 : i32
    return %arg0, %c0_i32, %c0_i32_0, %c0_i32_1 : i32, i32, i32, i32
  }
}

</mosaic_0001>

<llo_original>
// kernel: tpu_custom_call.1
$region0: #{tpu_custom_call.1}
  #allocation0 [shape = 'u32[]', space=smem, size = 0x4, offset = 0x4, fixed_abs, tag = 'smem constant byte address 0x4 - core index']
  #allocation1 [shape = 'u32[72,128]{1,0:T(1,128)}', space=vmem, size = 0x9000, scoped, tag = 'internal scratch']
  %s0 = inlined_call_operand.hbm [shape: f32[2,2,128], index: 0, kind: input, shape index: {}]
  %s1 = inlined_call_operand.hbm [shape: f32[2,2,128], index: 1, kind: input, shape index: {}]
  %s2 = inlined_call_operand.hbm [shape: f32[1,2,1,128], index: 2, kind: output, shape index: {0}]
  %s3 = inlined_call_operand.hbm [shape: f32[1,2,1,128], index: 3, kind: output, shape index: {1}]
  %s4 = inlined_call_operand.hbm [shape: f32[1,2,1,128], index: 4, kind: output, shape index: {2}]
  %s5 = inlined_call_operand.hbm [shape: f32[1,2,1,128], index: 5, kind: output, shape index: {3}]
  %6 = xla_tuple %s2, %s3, %s4, %s5
  %s7 = sld [smem:[#allocation0]]
  $region54: #{tpu_custom_call.1} parent=0
    _
  %s9 = ssub.s32 1, %s7
  %s10 = scalar_select 0, %s9, %s7
  $region1: #{tpu_custom_call.1} parent=0
    #allocation2 [shape = 'u8[2048]{0}', space=vmem, size = 0x800, scoped, tag = 'input window, operand 0, single buffered']
    #allocation3 [shape = 's32[1]{0}', space=sflag, size = 0x4, scoped, tag = 'scoped memory for tpu_custom_call.1']
    #allocation4 [shape = 's32[1]{0}', space=sflag, size = 0x4, scoped, tag = 'scoped memory for tpu_custom_call.1']
    #allocation5 [shape = 'u8[2048]{0}', space=vmem, size = 0x800, scoped, tag = 'input window, operand 1, single buffered']
    #allocation6 [shape = 's32[1]{0}', space=sflag, size = 0x4, scoped, tag = 'scoped memory for tpu_custom_call.1']
    #allocation7 [shape = 'u8[1024]{0}', space=vmem, size = 0x400, scoped, tag = 'output window, operand 0, single buffered']
    #allocation8 [shape = 'u8[1024]{0}', space=vmem, size = 0x400, scoped, tag = 'output window, operand 1, single buffered']
    #allocation9 [shape = 's32[1]{0}', space=sflag, size = 0x4, scoped, tag = 'scoped memory for tpu_custom_call.1']
    #allocation10 [shape = 'u8[1024]{0}', space=vmem, size = 0x400, scoped, tag = 'output window, operand 2, single buffered']
    #allocation11 [shape = 'u8[1024]{0}', space=vmem, size = 0x400, scoped, tag = 'output window, operand 3, single buffered']
    #allocation12 [shape = 's32[1]{0}', space=sflag, size = 0x4, scoped, tag = 'scoped memory for tpu_custom_call.1']
    %11 = vsyncpa [#allocation3], 0
    %12 = vsyncpa [#allocation6], 0
    %13 = vsyncpa [#allocation4], 0
    %14 = vsyncpa [#allocation9], 0
    %15 = vsyncpa [#allocation12], 0
    // Predicated region
    $region2: #{tpu_custom_call.1} parent=1 // pred_check
      _
    $region3: #{tpu_custom_call.1} parent=1 // pred_check_branch
      %17 = sbr.rel (0) target = $region5
    $region4: #{tpu_custom_call.1} parent=1 // pred_region
      %s18 = sadd.s32 0, 0
      %20 = vsyncadd [#allocation3], 0
      %s21 = smul.addr %s18, 2
      %s22 = scalar_lea.hbm %s0, %s21
      %s23 = sshll.u32 %s22, 4
      %s24 = int_to_ptr.hbm [resolvable:$true] %s23
      %s25 = sshll.u32 [#allocation2], 4
      %s26 = int_to_ptr.vmem [resolvable:$true] %s25
      %31 = dma.hbm_to_vmem [thread:$0]  %s24, 64, %s26, [#allocation3], 32, 32, 2
    $region5: #{tpu_custom_call.1} parent=1 // pred_fallthru
      _
    // Predicated region
    $region6: #{tpu_custom_call.1} parent=1 // pred_check
      _
    $region7: #{tpu_custom_call.1} parent=1 // pred_check_branch
      %33 = sbr.rel (0) target = $region9
    $region8: #{tpu_custom_call.1} parent=1 // pred_region
      %s34 = sadd.s32 0, 0
      %36 = vsyncadd [#allocation6], 0
      %s37 = smul.addr %s34, 2
      %s38 = scalar_lea.hbm %s1, %s37
      %s39 = sshll.u32 %s38, 4
      %s40 = int_to_ptr.hbm [resolvable:$true] %s39
      %s41 = sshll.u32 [#allocation5], 4
      %s42 = int_to_ptr.vmem [resolvable:$true] %s41
      %47 = dma.hbm_to_vmem [thread:$0]  %s40, 64, %s42, [#allocation6], 32, 32, 2
    $region9: #{tpu_custom_call.1} parent=1 // pred_fallthru
      _
    // Predicated region
    $region10: #{tpu_custom_call.1} parent=1 // pred_check
      _
    $region11: #{tpu_custom_call.1} parent=1 // pred_check_branch
      %49 = sbr.rel (0) target = $region13
    $region12: #{tpu_custom_call.1} parent=1 // pred_region
      %51 = dma.done [#allocation3], 64
    $region13: #{tpu_custom_call.1} parent=1 // pred_fallthru
      _
    // Predicated region
    $region14: #{tpu_custom_call.1} parent=1 // pred_check
      _
    $region15: #{tpu_custom_call.1} parent=1 // pred_check_branch
      %53 = sbr.rel (0) target = $region17
    $region16: #{tpu_custom_call.1} parent=1 // pred_region
      %55 = dma.done [#allocation6], 64
    $region17: #{tpu_custom_call.1} parent=1 // pred_fallthru
      _
    %s56 = sadd.s32 0, 0
    %s57 = sadd.s32 0, 0
    %p58 = scmp.eq.s32.totalorder 0, 0
    // Predicated region
    $region18: #{tpu_custom_call.1} parent=1 // pred_check
      %p59 = pneg %p58
    $region19: #{tpu_custom_call.1} parent=1 // pred_check_branch
      %61 = sbr.rel (%p59) target = $region21
    $region20: #{tpu_custom_call.1} parent=1 // pred_region
      %62 = vst [vmem:[#allocation7] sm:$0x1] 0.0
      %63 = vst [vmem:[#allocation7 + $0x1] sm:$0x1] 0.0
      %64 = vst [vmem:[#allocation8] sm:$0x1] 0.0
      %65 = vst [vmem:[#allocation8 + $0x1] sm:$0x1] 0.0
      %66 = vst [vmem:[#allocation10] sm:$0x1] 0.0
      %67 = vst [vmem:[#allocation10 + $0x1] sm:$0x1] 0.0
      %68 = vst [vmem:[#allocation11] sm:$0x1] 0.0
      %69 = vst [vmem:[#allocation11 + $0x1] sm:$0x1] 0.0
    $region21: #{tpu_custom_call.1} parent=1 // pred_fallthru
      _
    %v70 = vld [vmem:[#allocation2] sm:$0x3]
    %v71 = vld [vmem:[#allocation2 + $0x2] sm:$0x3]
    %v72 = vld [vmem:[#allocation5] sm:$0x3]
    %v73 = vld [vmem:[#allocation5 + $0x2] sm:$0x3]
    %v74 = vand.u32 2147483647, %v70
    %v75 = vand.u32 2147483647, %v71
    %v76 = vsub.f32 0.0, %v74
    %v77 = vsub.f32 0.0, %v75
    %v78 = vmul.f32 %v76, 1.442695
    %v79 = vpow.pop %v78
    %v80 = vmul.f32 %v77, 1.442695
    %v81 = vpow.pop %v80
    %v82 = vadd.f32 %v79, 1.0
    %v83 = vadd.f32 %v81, 1.0
    %v84 = vlog2.pop %v82
    %v85 = vmul.f32 %v84, 0.6931472
    %v86 = vlog2.pop %v83
    %v87 = vmul.f32 %v86, 0.6931472
    %v88 = vmax.f32 %v70, 0.0
    %v89 = vmax.f32 %v71, 0.0
    %v90 = vmul.f32 %v70, %v72
    %v91 = vmul.f32 %v71, %v73
    %v92 = vsub.f32 %v88, %v90
    %v93 = vsub.f32 %v89, %v91
    %v94 = vadd.f32 %v92, %v85
    %v95 = vadd.f32 %v93, %v87
    %v96 = vrcp.pop %v82
    %v97 = vrcp.pop %v83
    %v98 = vmul.f32 %v82, %v96
    %v99 = vmul.f32 %v83, %v97
    %v100 = vsub.f32 2.0, %v98
    %v101 = vsub.f32 2.0, %v99
    %v102 = vmul.f32 %v96, %v100
    %v103 = vmul.f32 %v97, %v101
    %vm104 = vcmp.ge.f32.partialorder %v70, 0.0
    %vm105 = vcmp.ge.f32.partialorder %v71, 0.0
    %v106 = vmul.f32 %v79, %v102
    %v107 = vmul.f32 %v81, %v103
    %v108 = vsel %vm104, %v102, %v106
    %v109 = vsel %vm105, %v103, %v107
    %v110 = vsub.f32 %v108, %v72
    %v111 = vsub.f32 %v109, %v73
    %v112 = vmul.f32 %v110, %v110
    %v113 = vmul.f32 %v111, %v111
    %v114 = vmul.f32 %v112, %v94
    %v115 = vmul.f32 %v113, %v95
    %v116 = vld [vmem:[#allocation7] sm:$0x1]
    %v117 = vld [vmem:[#allocation7 + $0x1] sm:$0x1]
    %vm118 = vcmask 1041408
    %v119 = vsel %vm118, %v114, 0.0
    %v120 = vrot.slane %v119, 4
    %v121 = vadd.f32 %v119, %v120
    %v122 = vrot.slane %v121, 2
    %v123 = vadd.f32 %v121, %v122
    %v124 = vrot.slane %v123, 1
    %v125 = vadd.f32 %v123, %v124
    %v126 = vsel %vm118, %v115, 0.0
    %v127 = vrot.slane %v126, 4
    %v128 = vadd.f32 %v126, %v127
    %v129 = vrot.slane %v128, 2
    %v130 = vadd.f32 %v128, %v129
    %v131 = vrot.slane %v130, 1
    %v132 = vadd.f32 %v130, %v131
    %v133 = vadd.f32 %v116, %v125
    %v134 = vadd.f32 %v117, %v132
    %135 = vst [vmem:[#allocation7] sm:$0x1] %v133
    %136 = vst [vmem:[#allocation7 + $0x1] sm:$0x1] %v134
    %v137 = vld [vmem:[#allocation8] sm:$0x1]
    %v138 = vld [vmem:[#allocation8 + $0x1] sm:$0x1]
    %v139 = vmul.f32 %v108, %v72
    %v140 = vmul.f32 %v109, %v73
    %v141 = vsel %vm118, %v139, 0.0
    %v142 = vrot.slane %v141, 4
    %v143 = vadd.f32 %v141, %v142
    %v144 = vrot.slane %v143, 2
    %v145 = vadd.f32 %v143, %v144
    %v146 = vrot.slane %v145, 1
    %v147 = vadd.f32 %v145, %v146
    %v148 = vsel %vm118, %v140, 0.0
    %v149 = vrot.slane %v148, 4
    %v150 = vadd.f32 %v148, %v149
    %v151 = vrot.slane %v150, 2
    %v152 = vadd.f32 %v150, %v151
    %v153 = vrot.slane %v152, 1
    %v154 = vadd.f32 %v152, %v153
    %v155 = vadd.f32 %v137, %v147
    %v156 = vadd.f32 %v138, %v154
    %157 = vst [vmem:[#allocation8] sm:$0x1] %v155
    %158 = vst [vmem:[#allocation8 + $0x1] sm:$0x1] %v156
    %v159 = vld [vmem:[#allocation10] sm:$0x1]
    %v160 = vld [vmem:[#allocation10 + $0x1] sm:$0x1]
    %v161 = vsel %vm118, %v108, 0.0
    %v162 = vrot.slane %v161, 4
    %v163 = vadd.f32 %v161, %v162
    %v164 = vrot.slane %v163, 2
    %v165 = vadd.f32 %v163, %v164
    %v166 = vrot.slane %v165, 1
    %v167 = vadd.f32 %v165, %v166
    %v168 = vsel %vm118, %v109, 0.0
    %v169 = vrot.slane %v168, 4
    %v170 = vadd.f32 %v168, %v169
    %v171 = vrot.slane %v170, 2
    %v172 = vadd.f32 %v170, %v171
    %v173 = vrot.slane %v172, 1
    %v174 = vadd.f32 %v172, %v173
    %v175 = vadd.f32 %v159, %v167
    %v176 = vadd.f32 %v160, %v174
    %177 = vst [vmem:[#allocation10] sm:$0x1] %v175
    %178 = vst [vmem:[#allocation10 + $0x1] sm:$0x1] %v176
    %v179 = vld [vmem:[#allocation11] sm:$0x1]
    %v180 = vld [vmem:[#allocation11 + $0x1] sm:$0x1]
    %v181 = vsel %vm118, %v72, 0.0
    %v182 = vrot.slane %v181, 4
    %v183 = vadd.f32 %v181, %v182
    %v184 = vrot.slane %v183, 2
    %v185 = vadd.f32 %v183, %v184
    %v186 = vrot.slane %v185, 1
    %v187 = vadd.f32 %v185, %v186
    %v188 = vsel %vm118, %v73, 0.0
    %v189 = vrot.slane %v188, 4
    %v190 = vadd.f32 %v188, %v189
    %v191 = vrot.slane %v190, 2
    %v192 = vadd.f32 %v190, %v191
    %v193 = vrot.slane %v192, 1
    %v194 = vadd.f32 %v192, %v193
    %v195 = vadd.f32 %v179, %v187
    %v196 = vadd.f32 %v180, %v194
    %197 = vst [vmem:[#allocation11] sm:$0x1] %v195
    %198 = vst [vmem:[#allocation11 + $0x1] sm:$0x1] %v196
    // Predicated region
    $region22: #{tpu_custom_call.1} parent=1 // pred_check
      _
    $region23: #{tpu_custom_call.1} parent=1 // pred_check_branch
      %200 = sbr.rel (0) target = $region25
    $region24: #{tpu_custom_call.1} parent=1 // pred_region
      %202 = vsyncadd [#allocation4], 0
      %s203 = sshll.u32 [#allocation7], 4
      %s204 = int_to_ptr.vmem [resolvable:$true] %s203
      %s205 = sshll.u32 %s2, 4
      %s206 = int_to_ptr.hbm [resolvable:$true] %s205
      %211 = dma.vmem_to_hbm [thread:$0]  %s204, 32, %s206, [#allocation4], 16, 16, 1
    $region25: #{tpu_custom_call.1} parent=1 // pred_fallthru
      _
    // Predicated region
    $region26: #{tpu_custom_call.1} parent=1 // pred_check
      _
    $region27: #{tpu_custom_call.1} parent=1 // pred_check_branch
      %213 = sbr.rel (0) target = $region29
    $region28: #{tpu_custom_call.1} parent=1 // pred_region
      %215 = vsyncadd [#allocation9], 0
      %s216 = sshll.u32 [#allocation8], 4
      %s217 = int_to_ptr.vmem [resolvable:$true] %s216
      %s218 = sshll.u32 %s3, 4
      %s219 = int_to_ptr.hbm [resolvable:$true] %s218
      %224 = dma.vmem_to_hbm [thread:$0]  %s217, 32, %s219, [#allocation9], 16, 16, 1
    $region29: #{tpu_custom_call.1} parent=1 // pred_fallthru
      _
    // Predicated region
    $region30: #{tpu_custom_call.1} parent=1 // pred_check
      _
    $region31: #{tpu_custom_call.1} parent=1 // pred_check_branch
      %226 = sbr.rel (0) target = $region33
    $region32: #{tpu_custom_call.1} parent=1 // pred_region
      %228 = vsyncadd [#allocation9], 0
      %s229 = sshll.u32 [#allocation10], 4
      %s230 = int_to_ptr.vmem [resolvable:$true] %s229
      %s231 = sshll.u32 %s4, 4
      %s232 = int_to_ptr.hbm [resolvable:$true] %s231
      %237 = dma.vmem_to_hbm [thread:$0]  %s230, 32, %s232, [#allocation9], 16, 16, 1
    $region33: #{tpu_custom_call.1} parent=1 // pred_fallthru
      _
    // Predicated region
    $region34: #{tpu_custom_call.1} parent=1 // pred_check
      _
    $region35: #{tpu_custom_call.1} parent=1 // pred_check_branch
      %239 = sbr.rel (0) target = $region37
    $region36: #{tpu_custom_call.1} parent=1 // pred_region
      %241 = vsyncadd [#allocation12], 0
      %s242 = sshll.u32 [#allocation11], 4
      %s243 = int_to_ptr.vmem [resolvable:$true] %s242
      %s244 = sshll.u32 %s5, 4
      %s245 = int_to_ptr.hbm [resolvable:$true] %s244
      %250 = dma.vmem_to_hbm [thread:$0]  %s243, 32, %s245, [#allocation12], 16, 16, 1
    $region37: #{tpu_custom_call.1} parent=1 // pred_fallthru
      _
    // Predicated region
    $region38: #{tpu_custom_call.1} parent=1 // pred_check
      _
    $region39: #{tpu_custom_call.1} parent=1 // pred_check_branch
      %252 = sbr.rel (0) target = $region41
    $region40: #{tpu_custom_call.1} parent=1 // pred_region
      %254 = dma.done [#allocation4], 32
    $region41: #{tpu_custom_call.1} parent=1 // pred_fallthru
      _
    // Predicated region
    $region42: #{tpu_custom_call.1} parent=1 // pred_check
      _
    $region43: #{tpu_custom_call.1} parent=1 // pred_check_branch
      %256 = sbr.rel (0) target = $region45
    $region44: #{tpu_custom_call.1} parent=1 // pred_region
      %258 = dma.done [#allocation9], 32
    $region45: #{tpu_custom_call.1} parent=1 // pred_fallthru
      _
    // Predicated region
    $region46: #{tpu_custom_call.1} parent=1 // pred_check
      _
    $region47: #{tpu_custom_call.1} parent=1 // pred_check_branch
      %260 = sbr.rel (0) target = $region49
    $region48: #{tpu_custom_call.1} parent=1 // pred_region
      %262 = dma.done [#allocation9], 32
    $region49: #{tpu_custom_call.1} parent=1 // pred_fallthru
      _
    // Predicated region
    $region50: #{tpu_custom_call.1} parent=1 // pred_check
      _
    $region51: #{tpu_custom_call.1} parent=1 // pred_check_branch
      %264 = sbr.rel (0) target = $region53
    $region52: #{tpu_custom_call.1} parent=1 // pred_region
      %266 = dma.done [#allocation12], 32
    $region53: #{tpu_custom_call.1} parent=1 // pred_fallthru
      _
    %267 = vsyncpa [#allocation3], 1
    %268 = vsyncpa [#allocation6], 1
    %269 = vsyncpa [#allocation4], 1
    %270 = vsyncpa [#allocation9], 1
    %271 = vsyncpa [#allocation12], 1

</llo_original>
